<compile_context>
chip_gen: v5e
topology: v5e:2x2
jax: 0.10.0
libtpu: 0.0.40
codegen_flags: <defaults>
</compile_context>

<pallas_src>
import functools

import jax
import jax.numpy as jnp
from jax.experimental import pallas as pl
from jax.experimental.pallas import tpu as pltpu

HID1 = 500
HID2 = 128
LANE = 128

# Above this many bytes of resident weights, single-buffer the constant blocks
# (double-buffering e.g. a 8 MiB f32 W1 burns 16 MiB -- past v5e's 16 MiB scoped
# default and half of v7x's 32 MiB default).  At small sizes keep the default path.
_SINGLE_BUFFER_THRESHOLD_BYTES = 4 << 20


def _round_up(n, m):
    return ((n + m - 1) // m) * m


def _pick_block_b(batch):
    """Batch-tile heuristic.

    * B <= 8: one block equal to the full batch dim (allowed by BlockSpec rules).
    * 8 < B < 1024: split into ~2 tiles so v7x's two TensorCores both get work and
      the DMA/compute pipeline has >=2 steps (multiple of 8 sublanes).
    * B >= 1024: 512-row tiles (per-step overhead ~0.35us; big tiles hit ~85% of
      the HBM roofline), even-ish step counts.
    """
    if batch <= 8:
        return batch
    if batch >= 1024:
        return 512
    return max(8, _round_up(pl.cdiv(batch, 2), 8))


def actor_kernel(x_ref, w1_ref, b1_ref, w2_ref, b2_ref, w3_ref, b3_ref, o_ref):
    # obs is f32 in HBM; cast to the weights' compute dtype on-chip (VPU, hidden
    # under the MXU).  Accumulate every matmul in f32; bias/ReLU/tanh in f32.
    x = x_ref[...].astype(w1_ref.dtype)
    # FC1 + ReLU
    h1 = jnp.dot(x, w1_ref[...], preferred_element_type=jnp.float32)
    h1 = jnp.maximum(h1 + b1_ref[...], 0.0)
    # FC2 + ReLU
    h2 = jnp.dot(h1.astype(w2_ref.dtype), w2_ref[...],
                 preferred_element_type=jnp.float32)
    h2 = jnp.maximum(h2 + b2_ref[...], 0.0)
    # FC3 + tanh
    h3 = jnp.dot(h2.astype(w3_ref.dtype), w3_ref[...],
                 preferred_element_type=jnp.float32)
    o_ref[...] = jnp.tanh(h3 + b3_ref[...]).astype(o_ref.dtype)


@functools.partial(jax.jit, static_argnames=("block_b",))
def ddpg_actor_forward(obs, padded_params, block_b=None):
    """obs: [B, dim_observation] f32.  padded_params: dict from pad_params().

    The compute dtype of the MXU operands is whatever dtype the padded weights
    carry (f32, or bf16 -- recommended on v5e/v6e/v7x alike); accumulation and
    all nonlinearities are f32.  Returns [B, dim_action] f32 (no padding).
    """
    p = padded_params
    B, d_obs = obs.shape
    d_obs_w, h1_p = p["W1"].shape
    h2_p, d_act = p["W3"].shape
    assert d_obs_w == d_obs, "padded_params were built for a different dim_observation"

    if block_b is None:
        block_b = _pick_block_b(B)
    # obs/out are f32 in HBM, so 8-sublane granularity suffices even on the bf16
    # compute path (the bf16 cast happens inside the kernel).
    assert block_b == B or block_b % 8 == 0

    grid = (pl.cdiv(B, block_b),)   # ragged last block handled by Pallas

    weight_bytes = sum(a.size * a.dtype.itemsize for a in p.values())
    single_buffer = weight_bytes > _SINGLE_BUFFER_THRESHOLD_BYTES

    def const_spec(shape):
        # Constant index_map => block fetched once, resident in VMEM.  When the
        # weights are big, single-buffer them to halve their VMEM footprint.
        if single_buffer:
            return pl.BlockSpec(shape, lambda i: (0, 0), pipeline_mode=pl.Buffered(1))
        return pl.BlockSpec(shape, lambda i: (0, 0))

    # Explicit scoped-VMEM budget: resident weights (+double-buffer if applicable)
    # + double-buffered obs/out tiles + generous slack for kernel temporaries.
    wbuf = 1 if single_buffer else 2
    io_tile_bytes = 2 * block_b * (d_obs * obs.dtype.itemsize + d_act * 4)
    vmem_limit = int(min(max(wbuf * weight_bytes + io_tile_bytes + (12 << 20),
                             16 << 20), 64 << 20))

    flops = 2 * B * (d_obs * h1_p + h1_p * h2_p + h2_p * d_act)
    bytes_accessed = (B * d_obs * obs.dtype.itemsize
                      + weight_bytes
                      + B * d_act * 4)

    out = pl.pallas_call(
        actor_kernel,
        out_shape=jax.ShapeDtypeStruct((B, d_act), jnp.float32),
        grid_spec=pltpu.PrefetchScalarGridSpec(
            num_scalar_prefetch=0,
            grid=grid,
            in_specs=[
                # obs batch tile; last (partial) block is masked by Pallas.
                pl.BlockSpec((block_b, d_obs), lambda i: (i, 0)),
                const_spec((d_obs, h1_p)), const_spec((1, h1_p)),   # FC1
                const_spec((h1_p, h2_p)),  const_spec((1, h2_p)),   # FC2
                const_spec((h2_p, d_act)), const_spec((1, d_act)),  # FC3
            ],
            out_specs=pl.BlockSpec((block_b, d_act), lambda i: (i, 0)),
        ),
        compiler_params=pltpu.CompilerParams(
            # Batch axis is independent; with >=2 grid steps it shards across
            # both v7x TensorCores.
            dimension_semantics=("parallel",),
            vmem_limit_bytes=vmem_limit),
        cost_estimate=pl.CostEstimate(
            flops=flops,
            transcendentals=B * d_act,
            bytes_accessed=bytes_accessed),
    )(obs, p["W1"], p["b1"], p["W2"], p["b2"], p["W3"], p["b3"])

    return out


def init_params(key, dim_observation, dim_action):
    """Unpadded params, deterministic init mimicking nn.Linear's U(+-1/sqrt(fan_in))."""
    ks = jax.random.split(key, 6)

    def linear(kw, kb, fan_in, fan_out):
        bound = 1.0 / jnp.sqrt(float(fan_in))
        W = jax.random.uniform(kw, (fan_in, fan_out), jnp.float32, -bound, bound)
        b = jax.random.uniform(kb, (1, fan_out), jnp.float32, -bound, bound)
        return W, b

    W1, b1 = linear(ks[0], ks[1], dim_observation, HID1)
    W2, b2 = linear(ks[2], ks[3], HID1, HID2)
    W3, b3 = linear(ks[4], ks[5], HID2, dim_action)
    return {"W1": W1, "b1": b1, "W2": W2, "b2": b2, "W3": W3, "b3": b3}


def pad_params(p, compute_dtype=jnp.float32):
    """One-time weight prep: pad the hidden dim 500->512 and pre-cast W1/W2 to the
    MXU compute dtype (f32, or bf16 for the fast path on v5e/v6e/v7x).

    ReLU(0)=0 and the zero-padded W2 rows make the padded network bit-identical to
    the original on the real columns.  d_obs and d_act stay unpadded (full-dim
    BlockSpecs), so no per-call padding of obs or slicing of the output is needed.
    Biases and W3 stay f32.
    """
    d_obs = p["W1"].shape[0]
    h1_p = _round_up(HID1, LANE)      # 500 -> 512
    pad2 = lambda a, r, c: jnp.pad(a, ((0, r - a.shape[0]), (0, c - a.shape[1])))
    cast = lambda a: a.astype(compute_dtype)
    return {
        "W1": cast(pad2(p["W1"], d_obs, h1_p)),   # [d_obs, 512]
        "b1": pad2(p["b1"], 1, h1_p),             # f32
        "W2": cast(pad2(p["W2"], h1_p, HID2)),    # [512, 128], zero rows 500:512
        "b2": p["b2"],                            # f32
        "W3": p["W3"],                            # [128, d_act], f32 (tiny)
        "b3": p["b3"],                            # f32
    }


def reference_forward(obs, p):
    h = jnp.maximum(obs @ p["W1"] + p["b1"], 0.0)
    h = jnp.maximum(h @ p["W2"] + p["b2"], 0.0)
    return jnp.tanh(h @ p["W3"] + p["b3"])


if __name__ == "__main__":
    key = jax.random.PRNGKey(0)
    k_obs, k_params = jax.random.split(key)

    batch = 8
    dim_observation = 32
    dim_action = 4

    obs = jax.random.normal(k_obs, (batch, dim_observation), jnp.float32)
    params = init_params(k_params, dim_observation, dim_action)
    ref = reference_forward(obs, params)

    # f32 weight path (exact, all chips).
    out = jax.block_until_ready(ddpg_actor_forward(obs, pad_params(params)))
    assert out.shape == (batch, dim_action)
    assert jnp.allclose(out, ref, atol=1e-5, rtol=1e-5)

    # bf16 MXU-operand fast path (recommended on v5e as well as v6e/v7x): weights
    # pre-cast once in pad_params, f32 accumulation, looser tolerance.
    out_bf16 = jax.block_until_ready(
        ddpg_actor_forward(obs, pad_params(params, compute_dtype=jnp.bfloat16)))
    assert out_bf16.shape == (batch, dim_action)
    assert jnp.allclose(out_bf16, ref, atol=3e-2, rtol=3e-2)

    # Larger, non-multiple batch: exercises >=2 grid steps (dual-TC sharding) and
    # the ragged last batch block (garbage rows never written back).
    obs_big = jax.random.normal(k_obs, (37, dim_observation), jnp.float32)
    ref_big = reference_forward(obs_big, params)
    out_big = jax.block_until_ready(ddpg_actor_forward(obs_big, pad_params(params)))
    assert out_big.shape == (37, dim_action)
    assert jnp.allclose(out_big, ref_big, atol=1e-5, rtol=1e-5)

    print("KERNEL_OK")
</pallas_src>

<mosaic_0001>
module attributes {stable_mosaic.version = 11 : i64} {
  func.func @actor_kernel(%arg0: i32, %arg1: memref<8x32xf32, #tpu.memory_space<vmem>>, %arg2: memref<32x512xf32, #tpu.memory_space<vmem>>, %arg3: memref<1x512xf32, #tpu.memory_space<vmem>>, %arg4: memref<512x128xf32, #tpu.memory_space<vmem>>, %arg5: memref<1x128xf32, #tpu.memory_space<vmem>>, %arg6: memref<128x4xf32, #tpu.memory_space<vmem>>, %arg7: memref<1x4xf32, #tpu.memory_space<vmem>>, %arg8: memref<8x4xf32, #tpu.memory_space<vmem>>) attributes {dimension_semantics = [#tpu.dimension_semantics<parallel>], iteration_bounds = array<i64: 1>, scalar_prefetch = 0 : i64, scratch_operands = 0 : i64, tpu.core_type = #tpu.core_type<tc>, window_params = [{transform_indices = @transform_0, window_bounds = array<i64: 8, 32>}, {pipeline_mode = #tpu.pipeline_mode<synchronous>, transform_indices = @transform_1, window_bounds = array<i64: 32, 512>}, {pipeline_mode = #tpu.pipeline_mode<synchronous>, transform_indices = @transform_2, window_bounds = array<i64: 1, 512>}, {pipeline_mode = #tpu.pipeline_mode<synchronous>, transform_indices = @transform_3, window_bounds = array<i64: 512, 128>}, {pipeline_mode = #tpu.pipeline_mode<synchronous>, transform_indices = @transform_4, window_bounds = array<i64: 1, 128>}, {pipeline_mode = #tpu.pipeline_mode<synchronous>, transform_indices = @transform_5, window_bounds = array<i64: 128, 4>}, {pipeline_mode = #tpu.pipeline_mode<synchronous>, transform_indices = @transform_6, window_bounds = array<i64: 1, 4>}, {transform_indices = @transform_7, window_bounds = array<i64: 8, 4>}]} {
    %c0 = arith.constant 0 : index
    %c0_0 = arith.constant 0 : index
    %0 = vector.load %arg1[%c0, %c0_0] : memref<8x32xf32, #tpu.memory_space<vmem>>, vector<8x32xf32>
    %c0_1 = arith.constant 0 : index
    %c0_2 = arith.constant 0 : index
    %1 = vector.load %arg2[%c0_1, %c0_2] : memref<32x512xf32, #tpu.memory_space<vmem>>, vector<32x512xf32>
    %cst = arith.constant dense<0.000000e+00> : vector<8x512xf32>
    %2 = tpu.matmul %0, %1, %cst {dimension_numbers = #tpu.dot_dimension_numbers<[1], [0], [0], [1], [0, 0, 1, 1], [], []>} : vector<8x32xf32>, vector<32x512xf32>, vector<8x512xf32> -> vector<8x512xf32>
    %c0_3 = arith.constant 0 : index
    %c0_4 = arith.constant 0 : index
    %3 = vector.load %arg3[%c0_3, %c0_4] : memref<1x512xf32, #tpu.memory_space<vmem>>, vector<1x512xf32>
    %4 = vector.broadcast %3 : vector<1x512xf32> to vector<8x512xf32>
    %5 = arith.addf %2, %4 : vector<8x512xf32>
    %cst_5 = arith.constant 0.000000e+00 : f32
    %6 = vector.broadcast %cst_5 : f32 to vector<8x512xf32>
    %7 = arith.maximumf %5, %6 : vector<8x512xf32>
    %c0_6 = arith.constant 0 : index
    %c0_7 = arith.constant 0 : index
    %8 = vector.load %arg4[%c0_6, %c0_7] : memref<512x128xf32, #tpu.memory_space<vmem>>, vector<512x128xf32>
    %cst_8 = arith.constant dense<0.000000e+00> : vector<8x128xf32>
    %9 = tpu.matmul %7, %8, %cst_8 {dimension_numbers = #tpu.dot_dimension_numbers<[1], [0], [0], [1], [0, 0, 1, 1], [], []>} : vector<8x512xf32>, vector<512x128xf32>, vector<8x128xf32> -> vector<8x128xf32>
    %c0_9 = arith.constant 0 : index
    %c0_10 = arith.constant 0 : index
    %10 = vector.load %arg5[%c0_9, %c0_10] : memref<1x128xf32, #tpu.memory_space<vmem>>, vector<1x128xf32>
    %11 = vector.broadcast %10 : vector<1x128xf32> to vector<8x128xf32>
    %12 = arith.addf %9, %11 : vector<8x128xf32>
    %cst_11 = arith.constant 0.000000e+00 : f32
    %13 = vector.broadcast %cst_11 : f32 to vector<8x128xf32>
    %14 = arith.maximumf %12, %13 : vector<8x128xf32>
    %c0_12 = arith.constant 0 : index
    %c0_13 = arith.constant 0 : index
    %15 = vector.load %arg6[%c0_12, %c0_13] : memref<128x4xf32, #tpu.memory_space<vmem>>, vector<128x4xf32>
    %cst_14 = arith.constant dense<0.000000e+00> : vector<8x4xf32>
    %16 = tpu.matmul %14, %15, %cst_14 {dimension_numbers = #tpu.dot_dimension_numbers<[1], [0], [0], [1], [0, 0, 1, 1], [], []>} : vector<8x128xf32>, vector<128x4xf32>, vector<8x4xf32> -> vector<8x4xf32>
    %c0_15 = arith.constant 0 : index
    %c0_16 = arith.constant 0 : index
    %17 = vector.load %arg7[%c0_15, %c0_16] : memref<1x4xf32, #tpu.memory_space<vmem>>, vector<1x4xf32>
    %18 = vector.broadcast %17 : vector<1x4xf32> to vector<8x4xf32>
    %19 = arith.addf %16, %18 : vector<8x4xf32>
    %20 = math.tanh %19 : vector<8x4xf32>
    %c0_17 = arith.constant 0 : index
    %c0_18 = arith.constant 0 : index
    %21 = vector.load %arg8[%c0_17, %c0_18] : memref<8x4xf32, #tpu.memory_space<vmem>>, vector<8x4xf32>
    tpu.vector_store %arg8[%c0_17, %c0_18], %20 {strides = array<i32>} : memref<8x4xf32, #tpu.memory_space<vmem>>, vector<8x4xf32>,
    return
  }
  func.func @transform_0(%arg0: i32) -> (i32, i32) {
    %c0_i32 = arith.constant 0 : i32
    %c0_i32_0 = arith.constant 0 : i32
    return %arg0, %c0_i32 : i32, i32
  }
  func.func @transform_1(%arg0: i32) -> (i32, i32) {
    %c0_i32 = arith.constant 0 : i32
    %c0_i32_0 = arith.constant 0 : i32
    %c0_i32_1 = arith.constant 0 : i32
    return %c0_i32, %c0_i32_0 : i32, i32
  }
  func.func @transform_2(%arg0: i32) -> (i32, i32) {
    %c0_i32 = arith.constant 0 : i32
    %c0_i32_0 = arith.constant 0 : i32
    %c0_i32_1 = arith.constant 0 : i32
    return %c0_i32, %c0_i32_0 : i32, i32
  }
  func.func @transform_3(%arg0: i32) -> (i32, i32) {
    %c0_i32 = arith.constant 0 : i32
    %c0_i32_0 = arith.constant 0 : i32
    %c0_i32_1 = arith.constant 0 : i32
    return %c0_i32, %c0_i32_0 : i32, i32
  }
  func.func @transform_4(%arg0: i32) -> (i32, i32) {
    %c0_i32 = arith.constant 0 : i32
    %c0_i32_0 = arith.constant 0 : i32
    %c0_i32_1 = arith.constant 0 : i32
    return %c0_i32, %c0_i32_0 : i32, i32
  }
  func.func @transform_5(%arg0: i32) -> (i32, i32) {
    %c0_i32 = arith.constant 0 : i32
    %c0_i32_0 = arith.constant 0 : i32
    %c0_i32_1 = arith.constant 0 : i32
    return %c0_i32, %c0_i32_0 : i32, i32
  }
  func.func @transform_6(%arg0: i32) -> (i32, i32) {
    %c0_i32 = arith.constant 0 : i32
    %c0_i32_0 = arith.constant 0 : i32
    %c0_i32_1 = arith.constant 0 : i32
    return %c0_i32, %c0_i32_0 : i32, i32
  }
  func.func @transform_7(%arg0: i32) -> (i32, i32) {
    %c0_i32 = arith.constant 0 : i32
    %c0_i32_0 = arith.constant 0 : i32
    return %arg0, %c0_i32 : i32, i32
  }
}

</mosaic_0001>

<llo_original>
// kernel: ddpg_actor_forward.1
$region0: #{ddpg_actor_forward.1}
  #allocation0 [shape = 'u32[]', space=smem, size = 0x4, offset = 0x4, fixed_abs, tag = 'smem constant byte address 0x4 - core index']
  #allocation1 [shape = 'u32[72,128]{1,0:T(1,128)}', space=vmem, size = 0x9000, scoped, tag = 'internal scratch']
  %s0 = inlined_call_operand.hbm [shape: f32[8,32], index: 0, kind: input, shape index: {}]
  %s1 = inlined_call_operand.vmem [shape: f32[32,512], index: 1, kind: input, shape index: {}]
  %s2 = inlined_call_operand.vmem [shape: f32[1,512], index: 2, kind: input, shape index: {}]
  %s3 = inlined_call_operand.hbm [shape: f32[512,128], index: 3, kind: input, shape index: {}]
  %s4 = inlined_call_operand.vmem [shape: f32[1,128], index: 4, kind: input, shape index: {}]
  %s5 = inlined_call_operand.vmem [shape: f32[128,4], index: 5, kind: input, shape index: {}]
  %s6 = inlined_call_operand.vmem [shape: f32[1,4], index: 6, kind: input, shape index: {}]
  %s7 = inlined_call_operand.vmem [shape: f32[8,4], index: 7, kind: output, shape index: {}]
  %s8 = sld [smem:[#allocation0]]
  $region46: #{ddpg_actor_forward.1} parent=0
    _
  %s10 = ssub.s32 1, %s8
  %s11 = scalar_select 0, %s10, %s8
  $region1: #{ddpg_actor_forward.1} parent=0
    #allocation2 [shape = 'u8[4096]{0}', space=vmem, size = 0x1000, scoped, tag = 'input window, operand 0, single buffered']
    #allocation3 [shape = 's32[1]{0}', space=sflag, size = 0x4, scoped, tag = 'scoped memory for ddpg_actor_forward.1']
    #allocation4 [shape = 'u8[262144]{0}', space=vmem, size = 0x40000, scoped, tag = 'input window, operand 3, single buffered']
    #allocation5 [shape = 's32[1]{0}', space=sflag, size = 0x4, scoped, tag = 'scoped memory for ddpg_actor_forward.1']
    %12 = vsyncpa [#allocation3], 0
    %13 = vsyncpa [#allocation5], 0
    // Predicated region
    $region2: #{ddpg_actor_forward.1} parent=1 // pred_check
      _
    $region3: #{ddpg_actor_forward.1} parent=1 // pred_check_branch
      %15 = sbr.rel (0) target = $region5
    $region4: #{ddpg_actor_forward.1} parent=1 // pred_region
      %17 = vsyncadd [#allocation3], 0
      %s19 = sshll.u32 %s0, 4
      %s20 = int_to_ptr.hbm [resolvable:$true] %s19
      %s21 = sshll.u32 [#allocation2], 4
      %s22 = int_to_ptr.vmem [resolvable:$true] %s21
      %24 = dma.hbm_to_vmem [thread:$0]  %s20, 128, %s22, [#allocation3]
    $region5: #{ddpg_actor_forward.1} parent=1 // pred_fallthru
      _
    // Predicated region
    $region6: #{ddpg_actor_forward.1} parent=1 // pred_check
      _
    $region7: #{ddpg_actor_forward.1} parent=1 // pred_check_branch
      %26 = sbr.rel (0) target = $region9
    $region8: #{ddpg_actor_forward.1} parent=1 // pred_region
      _
    $region9: #{ddpg_actor_forward.1} parent=1 // pred_fallthru
      _
    // Predicated region
    $region10: #{ddpg_actor_forward.1} parent=1 // pred_check
      _
    $region11: #{ddpg_actor_forward.1} parent=1 // pred_check_branch
      %28 = sbr.rel (0) target = $region13
    $region12: #{ddpg_actor_forward.1} parent=1 // pred_region
      _
    $region13: #{ddpg_actor_forward.1} parent=1 // pred_fallthru
      _
    // Predicated region
    $region14: #{ddpg_actor_forward.1} parent=1 // pred_check
      _
    $region15: #{ddpg_actor_forward.1} parent=1 // pred_check_branch
      %30 = sbr.rel (0) target = $region17
    $region16: #{ddpg_actor_forward.1} parent=1 // pred_region
      %32 = vsyncadd [#allocation5], 0
      %s33 = sshll.u32 %s3, 4
      %s34 = int_to_ptr.hbm [resolvable:$true] %s33
      %s35 = sshll.u32 [#allocation4], 4
      %s36 = int_to_ptr.vmem [resolvable:$true] %s35
      %41 = dma.hbm_to_vmem [thread:$0]  %s34, 8192, %s36, [#allocation5], 128, 128, 8
    $region17: #{ddpg_actor_forward.1} parent=1 // pred_fallthru
      _
    // Predicated region
    $region18: #{ddpg_actor_forward.1} parent=1 // pred_check
      _
    $region19: #{ddpg_actor_forward.1} parent=1 // pred_check_branch
      %43 = sbr.rel (0) target = $region21
    $region20: #{ddpg_actor_forward.1} parent=1 // pred_region
      _
    $region21: #{ddpg_actor_forward.1} parent=1 // pred_fallthru
      _
    // Predicated region
    $region22: #{ddpg_actor_forward.1} parent=1 // pred_check
      _
    $region23: #{ddpg_actor_forward.1} parent=1 // pred_check_branch
      %45 = sbr.rel (0) target = $region25
    $region24: #{ddpg_actor_forward.1} parent=1 // pred_region
      _
    $region25: #{ddpg_actor_forward.1} parent=1 // pred_fallthru
      _
    // Predicated region
    $region26: #{ddpg_actor_forward.1} parent=1 // pred_check
      _
    $region27: #{ddpg_actor_forward.1} parent=1 // pred_check_branch
      %47 = sbr.rel (0) target = $region29
    $region28: #{ddpg_actor_forward.1} parent=1 // pred_region
      _
    $region29: #{ddpg_actor_forward.1} parent=1 // pred_fallthru
      _
    // Predicated region
    $region30: #{ddpg_actor_forward.1} parent=1 // pred_check
      _
    $region31: #{ddpg_actor_forward.1} parent=1 // pred_check_branch
      %49 = sbr.rel (0) target = $region33
    $region32: #{ddpg_actor_forward.1} parent=1 // pred_region
      %51 = dma.done [#allocation3], 128
    $region33: #{ddpg_actor_forward.1} parent=1 // pred_fallthru
      _
    // Predicated region
    $region34: #{ddpg_actor_forward.1} parent=1 // pred_check
      _
    $region35: #{ddpg_actor_forward.1} parent=1 // pred_check_branch
      %53 = sbr.rel (0) target = $region37
    $region36: #{ddpg_actor_forward.1} parent=1 // pred_region
      %55 = dma.done [#allocation5], 8192
    $region37: #{ddpg_actor_forward.1} parent=1 // pred_fallthru
      _
    %v56 = vld [vmem:[#allocation2] sm:$0xff]
    %v57 = vld [vmem:[%s1] sm:$0xff]
    %v58 = vld [vmem:[%s1 + $0x8] sm:$0xff]
    %v59 = vld [vmem:[%s1 + $0x10] sm:$0xff]
    %v60 = vld [vmem:[%s1 + $0x18] sm:$0xff]
    %v61 = vld [vmem:[%s1 + $0x20] sm:$0xff]
    %v62 = vld [vmem:[%s1 + $0x28] sm:$0xff]
    %v63 = vld [vmem:[%s1 + $0x30] sm:$0xff]
    %v64 = vld [vmem:[%s1 + $0x38] sm:$0xff]
    %v65 = vld [vmem:[%s1 + $0x40] sm:$0xff]
    %v66 = vld [vmem:[%s1 + $0x48] sm:$0xff]
    %v67 = vld [vmem:[%s1 + $0x50] sm:$0xff]
    %v68 = vld [vmem:[%s1 + $0x58] sm:$0xff]
    %v69 = vld [vmem:[%s1 + $0x60] sm:$0xff]
    %v70 = vld [vmem:[%s1 + $0x68] sm:$0xff]
    %v71 = vld [vmem:[%s1 + $0x70] sm:$0xff]
    %v72 = vld [vmem:[%s1 + $0x78] sm:$0xff]
    %v73 = vld [vmem:[%s2] sm:$0xf]
    %v75 = vperm.slane %v73, 0
    %v76 = vperm.slane %v73, 1
    %v77 = vperm.slane %v73, 2
    %v78 = vperm.slane %v73, 3
    %vm83 = vcmask 261120
    %v85 = vsel %vm83, %v56, 0
    %87 = vmatpush.msra.mxu0 0.0
    %88 = vmatpush.msra.mxu0 0.0
    %89 = vmatpush.msra.mxu0 0.0
    %90 = vmatpush.msra.mxu0 0.0
    %91 = vmatpush.msra.mxu0 0.0
    %92 = vmatpush.msra.mxu0 0.0
    %93 = vmatpush.msra.mxu0 0.0
    %94 = vmatpush.msra.mxu0 0.0
    %95 = vmatpush.msra.mxu0 0.0
    %96 = vmatpush.msra.mxu0 0.0
    %97 = vmatpush.msra.mxu0 0.0
    %98 = vmatpush.msra.mxu0 0.0
    %99 = vmatpush.msra.mxu0 %v69
    %100 = vmatpush.msra.mxu0 %v65
    %101 = vmatpush.msra.mxu0 %v61
    %102 = vmatpush.msra.mxu0 %v57
    %103 = vmatmul.f32.gmra.mxu0 %v85
    %v104 = vpop.f32.mrf.mxu0
    %v105 = vadd.f32 %v75, %v104
    %106 = vdwg.mxu0
    %107 = vmatpush.msra.mxu0 0.0
    %108 = vmatpush.msra.mxu0 0.0
    %109 = vmatpush.msra.mxu0 0.0
    %110 = vmatpush.msra.mxu0 0.0
    %111 = vmatpush.msra.mxu0 0.0
    %112 = vmatpush.msra.mxu0 0.0
    %113 = vmatpush.msra.mxu0 0.0
    %114 = vmatpush.msra.mxu0 0.0
    %115 = vmatpush.msra.mxu0 0.0
    %116 = vmatpush.msra.mxu0 0.0
    %117 = vmatpush.msra.mxu0 0.0
    %118 = vmatpush.msra.mxu0 0.0
    %119 = vmatpush.msra.mxu0 %v70
    %120 = vmatpush.msra.mxu0 %v66
    %121 = vmatpush.msra.mxu0 %v62
    %122 = vmatpush.msra.mxu0 %v58
    %123 = vmatmul.f32.gmra.mxu0 %v85
    %v124 = vpop.f32.mrf.mxu0
    %v125 = vadd.f32 %v76, %v124
    %126 = vdwg.mxu0
    %127 = vmatpush.msra.mxu0 0.0
    %128 = vmatpush.msra.mxu0 0.0
    %129 = vmatpush.msra.mxu0 0.0
    %130 = vmatpush.msra.mxu0 0.0
    %131 = vmatpush.msra.mxu0 0.0
    %132 = vmatpush.msra.mxu0 0.0
    %133 = vmatpush.msra.mxu0 0.0
    %134 = vmatpush.msra.mxu0 0.0
    %135 = vmatpush.msra.mxu0 0.0
    %136 = vmatpush.msra.mxu0 0.0
    %137 = vmatpush.msra.mxu0 0.0
    %138 = vmatpush.msra.mxu0 0.0
    %139 = vmatpush.msra.mxu0 %v71
    %140 = vmatpush.msra.mxu0 %v67
    %141 = vmatpush.msra.mxu0 %v63
    %142 = vmatpush.msra.mxu0 %v59
    %143 = vmatmul.f32.gmra.mxu0 %v85
    %v144 = vpop.f32.mrf.mxu0
    %v145 = vadd.f32 %v77, %v144
    %146 = vdwg.mxu0
    %147 = vmatpush.msra.mxu0 0.0
    %148 = vmatpush.msra.mxu0 0.0
    %149 = vmatpush.msra.mxu0 0.0
    %150 = vmatpush.msra.mxu0 0.0
    %151 = vmatpush.msra.mxu0 0.0
    %152 = vmatpush.msra.mxu0 0.0
    %153 = vmatpush.msra.mxu0 0.0
    %154 = vmatpush.msra.mxu0 0.0
    %155 = vmatpush.msra.mxu0 0.0
    %156 = vmatpush.msra.mxu0 0.0
    %157 = vmatpush.msra.mxu0 0.0
    %158 = vmatpush.msra.mxu0 0.0
    %159 = vmatpush.msra.mxu0 %v72
    %160 = vmatpush.msra.mxu0 %v68
    %161 = vmatpush.msra.mxu0 %v64
    %162 = vmatpush.msra.mxu0 %v60
    %163 = vmatmul.f32.gmra.mxu0 %v85
    %v164 = vpop.f32.mrf.mxu0
    %v165 = vadd.f32 %v78, %v164
    %166 = vdwg.mxu0
    %v167 = vmax.f32 %v105, 0.0
    %v168 = vmax.f32 %v125, 0.0
    %v169 = vmax.f32 %v145, 0.0
    %v170 = vmax.f32 %v165, 0.0
    %v171 = vld [vmem:[#allocation4] sm:$0xff]
    %v172 = vld [vmem:[#allocation4 + $0x8] sm:$0xff]
    %v173 = vld [vmem:[#allocation4 + $0x10] sm:$0xff]
    %v174 = vld [vmem:[#allocation4 + $0x18] sm:$0xff]
    %v175 = vld [vmem:[#allocation4 + $0x20] sm:$0xff]
    %v176 = vld [vmem:[#allocation4 + $0x28] sm:$0xff]
    %v177 = vld [vmem:[#allocation4 + $0x30] sm:$0xff]
    %v178 = vld [vmem:[#allocation4 + $0x38] sm:$0xff]
    %v179 = vld [vmem:[#allocation4 + $0x40] sm:$0xff]
    %v180 = vld [vmem:[#allocation4 + $0x48] sm:$0xff]
    %v181 = vld [vmem:[#allocation4 + $0x50] sm:$0xff]
    %v182 = vld [vmem:[#allocation4 + $0x58] sm:$0xff]
    %v183 = vld [vmem:[#allocation4 + $0x60] sm:$0xff]
    %v184 = vld [vmem:[#allocation4 + $0x68] sm:$0xff]
    %v185 = vld [vmem:[#allocation4 + $0x70] sm:$0xff]
    %v186 = vld [vmem:[#allocation4 + $0x78] sm:$0xff]
    %v187 = vld [vmem:[#allocation4 + $0x80] sm:$0xff]
    %v188 = vld [vmem:[#allocation4 + $0x88] sm:$0xff]
    %v189 = vld [vmem:[#allocation4 + $0x90] sm:$0xff]
    %v190 = vld [vmem:[#allocation4 + $0x98] sm:$0xff]
    %v191 = vld [vmem:[#allocation4 + $0xa0] sm:$0xff]
    %v192 = vld [vmem:[#allocation4 + $0xa8] sm:$0xff]
    %v193 = vld [vmem:[#allocation4 + $0xb0] sm:$0xff]
    %v194 = vld [vmem:[#allocation4 + $0xb8] sm:$0xff]
    %v195 = vld [vmem:[#allocation4 + $0xc0] sm:$0xff]
    %v196 = vld [vmem:[#allocation4 + $0xc8] sm:$0xff]
    %v197 = vld [vmem:[#allocation4 + $0xd0] sm:$0xff]
    %v198 = vld [vmem:[#allocation4 + $0xd8] sm:$0xff]
    %v199 = vld [vmem:[#allocation4 + $0xe0] sm:$0xff]
    %v200 = vld [vmem:[#allocation4 + $0xe8] sm:$0xff]
    %v201 = vld [vmem:[#allocation4 + $0xf0] sm:$0xff]
    %v202 = vld [vmem:[#allocation4 + $0xf8] sm:$0xff]
    %v203 = vld [vmem:[#allocation4 + $0x100] sm:$0xff]
    %v204 = vld [vmem:[#allocation4 + $0x108] sm:$0xff]
    %v205 = vld [vmem:[#allocation4 + $0x110] sm:$0xff]
    %v206 = vld [vmem:[#allocation4 + $0x118] sm:$0xff]
    %v207 = vld [vmem:[#allocation4 + $0x120] sm:$0xff]
    %v208 = vld [vmem:[#allocation4 + $0x128] sm:$0xff]
    %v209 = vld [vmem:[#allocation4 + $0x130] sm:$0xff]
    %v210 = vld [vmem:[#allocation4 + $0x138] sm:$0xff]
    %v211 = vld [vmem:[#allocation4 + $0x140] sm:$0xff]
    %v212 = vld [vmem:[#allocation4 + $0x148] sm:$0xff]
    %v213 = vld [vmem:[#allocation4 + $0x150] sm:$0xff]
    %v214 = vld [vmem:[#allocation4 + $0x158] sm:$0xff]
    %v215 = vld [vmem:[#allocation4 + $0x160] sm:$0xff]
    %v216 = vld [vmem:[#allocation4 + $0x168] sm:$0xff]
    %v217 = vld [vmem:[#allocation4 + $0x170] sm:$0xff]
    %v218 = vld [vmem:[#allocation4 + $0x178] sm:$0xff]
    %v219 = vld [vmem:[#allocation4 + $0x180] sm:$0xff]
    %v220 = vld [vmem:[#allocation4 + $0x188] sm:$0xff]
    %v221 = vld [vmem:[#allocation4 + $0x190] sm:$0xff]
    %v222 = vld [vmem:[#allocation4 + $0x198] sm:$0xff]
    %v223 = vld [vmem:[#allocation4 + $0x1a0] sm:$0xff]
    %v224 = vld [vmem:[#allocation4 + $0x1a8] sm:$0xff]
    %v225 = vld [vmem:[#allocation4 + $0x1b0] sm:$0xff]
    %v226 = vld [vmem:[#allocation4 + $0x1b8] sm:$0xff]
    %v227 = vld [vmem:[#allocation4 + $0x1c0] sm:$0xff]
    %v228 = vld [vmem:[#allocation4 + $0x1c8] sm:$0xff]
    %v229 = vld [vmem:[#allocation4 + $0x1d0] sm:$0xff]
    %v230 = vld [vmem:[#allocation4 + $0x1d8] sm:$0xff]
    %v231 = vld [vmem:[#allocation4 + $0x1e0] sm:$0xff]
    %v232 = vld [vmem:[#allocation4 + $0x1e8] sm:$0xff]
    %v233 = vld [vmem:[#allocation4 + $0x1f0] sm:$0xff]
    %v234 = vld [vmem:[#allocation4 + $0x1f8] sm:$0xff]
    %v235 = vld [vmem:[%s4] sm:$0x1]
    %v237 = vperm.slane %v235, 0
    %239 = vmatpush.msra.mxu0 %v186
    %240 = vmatpush.msra.mxu0 %v185
    %241 = vmatpush.msra.mxu0 %v184
    %242 = vmatpush.msra.mxu0 %v183
    %243 = vmatpush.msra.mxu0 %v182
    %244 = vmatpush.msra.mxu0 %v181
    %245 = vmatpush.msra.mxu0 %v180
    %246 = vmatpush.msra.mxu0 %v179
    %247 = vmatpush.msra.mxu0 %v178
    %248 = vmatpush.msra.mxu0 %v177
    %249 = vmatpush.msra.mxu0 %v176
    %250 = vmatpush.msra.mxu0 %v175
    %251 = vmatpush.msra.mxu0 %v174
    %252 = vmatpush.msra.mxu0 %v173
    %253 = vmatpush.msra.mxu0 %v172
    %254 = vmatpush.msra.mxu0 %v171
    %255 = vmatmul.f32.gmra.mxu0 %v167
    %v256 = vpop.f32.mrf.mxu0
    %v257 = vadd.f32 %v237, %v256
    %258 = vdwg.mxu0
    %259 = vmatpush.msra.mxu0 %v202
    %260 = vmatpush.msra.mxu0 %v201
    %261 = vmatpush.msra.mxu0 %v200
    %262 = vmatpush.msra.mxu0 %v199
    %263 = vmatpush.msra.mxu0 %v198
    %264 = vmatpush.msra.mxu0 %v197
    %265 = vmatpush.msra.mxu0 %v196
    %266 = vmatpush.msra.mxu0 %v195
    %267 = vmatpush.msra.mxu0 %v194
    %268 = vmatpush.msra.mxu0 %v193
    %269 = vmatpush.msra.mxu0 %v192
    %270 = vmatpush.msra.mxu0 %v191
    %271 = vmatpush.msra.mxu0 %v190
    %272 = vmatpush.msra.mxu0 %v189
    %273 = vmatpush.msra.mxu0 %v188
    %274 = vmatpush.msra.mxu0 %v187
    %275 = vmatmul.f32.gmra.mxu0 %v168
    %v276 = vpop.f32.mrf.mxu0
    %v277 = vadd.f32 %v257, %v276
    %278 = vdwg.mxu0
    %279 = vmatpush.msra.mxu0 %v218
    %280 = vmatpush.msra.mxu0 %v217
    %281 = vmatpush.msra.mxu0 %v216
    %282 = vmatpush.msra.mxu0 %v215
    %283 = vmatpush.msra.mxu0 %v214
    %284 = vmatpush.msra.mxu0 %v213
    %285 = vmatpush.msra.mxu0 %v212
    %286 = vmatpush.msra.mxu0 %v211
    %287 = vmatpush.msra.mxu0 %v210
    %288 = vmatpush.msra.mxu0 %v209
    %289 = vmatpush.msra.mxu0 %v208
    %290 = vmatpush.msra.mxu0 %v207
    %291 = vmatpush.msra.mxu0 %v206
    %292 = vmatpush.msra.mxu0 %v205
    %293 = vmatpush.msra.mxu0 %v204
    %294 = vmatpush.msra.mxu0 %v203
    %295 = vmatmul.f32.gmra.mxu0 %v169
    %v296 = vpop.f32.mrf.mxu0
    %v297 = vadd.f32 %v277, %v296
    %298 = vdwg.mxu0
    %299 = vmatpush.msra.mxu0 %v234
    %300 = vmatpush.msra.mxu0 %v233
    %301 = vmatpush.msra.mxu0 %v232
    %302 = vmatpush.msra.mxu0 %v231
    %303 = vmatpush.msra.mxu0 %v230
    %304 = vmatpush.msra.mxu0 %v229
    %305 = vmatpush.msra.mxu0 %v228
    %306 = vmatpush.msra.mxu0 %v227
    %307 = vmatpush.msra.mxu0 %v226
    %308 = vmatpush.msra.mxu0 %v225
    %309 = vmatpush.msra.mxu0 %v224
    %310 = vmatpush.msra.mxu0 %v223
    %311 = vmatpush.msra.mxu0 %v222
    %312 = vmatpush.msra.mxu0 %v221
    %313 = vmatpush.msra.mxu0 %v220
    %314 = vmatpush.msra.mxu0 %v219
    %315 = vmatmul.f32.gmra.mxu0 %v170
    %v316 = vpop.f32.mrf.mxu0
    %v317 = vadd.f32 %v297, %v316
    %318 = vdwg.mxu0
    %v319 = vmax.f32 %v317, 0.0
    %v320 = vld [vmem:[%s5] sm:$0xff]
    %v321 = vld [vmem:[%s5 + $0x8] sm:$0xff]
    %v322 = vld [vmem:[%s5 + $0x10] sm:$0xff]
    %v323 = vld [vmem:[%s5 + $0x18] sm:$0xff]
    %v324 = vld [vmem:[%s5 + $0x20] sm:$0xff]
    %v325 = vld [vmem:[%s5 + $0x28] sm:$0xff]
    %v326 = vld [vmem:[%s5 + $0x30] sm:$0xff]
    %v327 = vld [vmem:[%s5 + $0x38] sm:$0xff]
    %v328 = vld [vmem:[%s5 + $0x40] sm:$0xff]
    %v329 = vld [vmem:[%s5 + $0x48] sm:$0xff]
    %v330 = vld [vmem:[%s5 + $0x50] sm:$0xff]
    %v331 = vld [vmem:[%s5 + $0x58] sm:$0xff]
    %v332 = vld [vmem:[%s5 + $0x60] sm:$0xff]
    %v333 = vld [vmem:[%s5 + $0x68] sm:$0xff]
    %v334 = vld [vmem:[%s5 + $0x70] sm:$0xff]
    %v335 = vld [vmem:[%s5 + $0x78] sm:$0xff]
    %v336 = vld [vmem:[%s6] sm:$0x1]
    %v338 = vperm.slane %v336, 0
    %340 = vmatpush.msra.mxu0 %v335
    %341 = vmatpush.msra.mxu0 %v334
    %342 = vmatpush.msra.mxu0 %v333
    %343 = vmatpush.msra.mxu0 %v332
    %344 = vmatpush.msra.mxu0 %v331
    %345 = vmatpush.msra.mxu0 %v330
    %346 = vmatpush.msra.mxu0 %v329
    %347 = vmatpush.msra.mxu0 %v328
    %348 = vmatpush.msra.mxu0 %v327
    %349 = vmatpush.msra.mxu0 %v326
    %350 = vmatpush.msra.mxu0 %v325
    %351 = vmatpush.msra.mxu0 %v324
    %352 = vmatpush.msra.mxu0 %v323
    %353 = vmatpush.msra.mxu0 %v322
    %354 = vmatpush.msra.mxu0 %v321
    %355 = vmatpush.msra.mxu0 %v320
    %356 = vmatmul.f32.gmra.mxu0 %v319
    %v357 = vpop.f32.mrf.mxu0
    %v358 = vadd.f32 %v338, %v357
    %359 = vdwg.mxu0
    %v360 = vtanh.pop %v358
    %vm361 = vcmask 31744
    %362 = vst.msk [vmem:[%s7] sm:$0xff] %vm361, %v360
    // Predicated region
    $region38: #{ddpg_actor_forward.1} parent=1 // pred_check
      _
    $region39: #{ddpg_actor_forward.1} parent=1 // pred_check_branch
      %364 = sbr.rel (0) target = $region41
    $region40: #{ddpg_actor_forward.1} parent=1 // pred_region
      _
    $region41: #{ddpg_actor_forward.1} parent=1 // pred_fallthru
      _
    // Predicated region
    $region42: #{ddpg_actor_forward.1} parent=1 // pred_check
      _
    $region43: #{ddpg_actor_forward.1} parent=1 // pred_check_branch
      %366 = sbr.rel (0) target = $region45
    $region44: #{ddpg_actor_forward.1} parent=1 // pred_region
      _
    $region45: #{ddpg_actor_forward.1} parent=1 // pred_fallthru
      _
    %367 = vsyncpa [#allocation3], 1
    %368 = vsyncpa [#allocation5], 1

</llo_original>
